<compile_context>
chip_gen: v7x
topology: tpu7x:2x2x1
jax: 0.10.0
libtpu: 0.0.40
codegen_flags: <defaults>
</compile_context>

<pallas_src>
import jax
import jax.numpy as jnp
from jax.experimental import pallas as pl
from jax.experimental.pallas import tpu as pltpu


def _conv_bn_silu_kernel(x_ref, w_ref, b_ref, o_ref):
    """One grid step: 1x1 conv (channel matmul) -> + folded BN bias -> SiLU.

    x_ref: (NB, C1, TL)   input channels x flattened-spatial tile (lane axis)
    w_ref: (TC2, C1)      conv weight with BN scale pre-folded
    b_ref: (TC2, 1)       folded BN bias (f32)
    o_ref: (NB, TC2, TL)
    """
    w = w_ref[...]
    b = b_ref[...]
    # NB is a small trace-time constant -> unrolled loop of MXU matmuls.
    for i in range(x_ref.shape[0]):
        y = jnp.dot(w, x_ref[i], preferred_element_type=jnp.float32) + b
        # SiLU: y * sigmoid(y); sigmoid(y) = 0.5*tanh(0.5*y) + 0.5 runs the
        # transcendental on the EUP slot (no f32 VALU divide).
        sig = 0.5 * jnp.tanh(0.5 * y) + 0.5
        o_ref[i] = (y * sig).astype(o_ref.dtype)


def _vmem_budget_bytes():
    """Per-call VMEM budget for block sizing, derived from the chip if possible."""
    try:
        info = pltpu.get_tpu_info()
        cap = int(getattr(info, "vmem_capacity_bytes", 0) or 0)
        if cap > 0:
            # Stay well under physical VMEM (v7x: 64 MiB) while still using
            # large tiles on v5e/v6e (128 MiB physical).
            return max(8 * 1024 * 1024, min(24 * 1024 * 1024, cap // 3))
    except Exception:
        pass
    return 16 * 1024 * 1024  # conservative: safe on every generation


def _choose_tiles(n, hw, c1, c2, itemsize, budget):
    """Pick (nb, tl, tc2): batch block, flattened-HW lane tile, and C2 tile.

    Accounts for the weight/bias footprint (not just the in/out blocks).
    """
    # --- weight (C2) tiling ---------------------------------------------------
    w_row_bytes = c1 * itemsize
    if 2 * c2 * w_row_bytes <= budget // 3:
        tc2 = c2                             # whole weight resident,
        w_resident = c2 * w_row_bytes        # single-buffered (pl.Buffered(1))
    else:
        tc2 = max(8, ((budget // 3) // (2 * w_row_bytes) // 8) * 8)
        tc2 = min(tc2, c2)
        w_resident = 2 * tc2 * w_row_bytes   # default double-buffered slice

    # --- flattened-HW (lane) tile --------------------------------------------
    avail = max(budget - w_resident - 2 * c2 * 4, 1 << 20)
    per_col = (c1 + tc2) * itemsize * 2      # in + out blocks, double-buffered
    cap = max(128, (avail // per_col) // 128 * 128)
    if hw <= cap:
        tl = hw                              # full (lane-dense) spatial extent
    else:
        tl = 0
        for t in range(cap, 127, -128):
            if hw % t == 0:
                tl = t
                break
        if tl == 0:
            tl = cap                         # uneven: Pallas masks last block

    # --- batch block: amortize per-step overhead for small feature maps ------
    nb_limit = min(n, 8, max(1, avail // (per_col * tl)))
    nb = 1
    for d in range(nb_limit, 0, -1):         # largest divisor of n (no ragged
        if n % d == 0:                       # batch blocks)
            nb = d
            break
    return nb, tl, tc2


def conv8_forward(x, weight, gamma, beta, running_mean, running_var, eps=1e-5):
    """Fused forward of Conv8: SiLU(BN_eval(Conv2d_{1x1, no bias}(x))). NCHW."""
    n, c1, h, w = x.shape
    c2, c1w, kh, kw = weight.shape
    assert c1w == c1 and kh == 1 and kw == 1, "only k=1 (module default) supported"

    hw = h * w
    dtype = x.dtype
    itemsize = jnp.dtype(dtype).itemsize

    # Contiguous (free) reshape: spatial dims flattened onto the lane axis.
    x3 = x.reshape(n, c1, hw)

    # Fold eval-mode BatchNorm into the conv weight (scale) and a bias, in f32.
    inv_std = jax.lax.rsqrt(running_var.astype(jnp.float32) + jnp.float32(eps))
    scale = gamma.astype(jnp.float32) * inv_std                           # (C2,)
    w_folded = (weight.reshape(c2, c1).astype(jnp.float32)
                * scale[:, None]).astype(dtype)                           # (C2, C1)
    bias = (beta.astype(jnp.float32)
            - running_mean.astype(jnp.float32) * scale).reshape(c2, 1)    # f32

    budget = _vmem_budget_bytes()
    nb, tl, tc2 = _choose_tiles(n, hw, c1, c2, itemsize, budget)
    grid = (pl.cdiv(n, nb), pl.cdiv(c2, tc2), pl.cdiv(hw, tl))

    # Grid-invariant operands are single-buffered (their index_map is constant,
    # so no pipelining is needed); a C2-tiled weight keeps default buffering.
    const_kwargs = {"pipeline_mode": pl.Buffered(1)} if tc2 == c2 else {}

    # Explicit scoped-VMEM limit: resident footprint + generous headroom
    # (capped below v7x's 64 MiB physical VMEM).
    footprint = (2 * nb * (c1 + tc2) * tl * itemsize   # in + out, double-buffered
                 + 2 * tc2 * c1 * itemsize             # weight (worst case 2x)
                 + 2 * tc2 * 4)                        # bias
    vmem_limit = int(min(48 * 1024 * 1024,
                         max(16 * 1024 * 1024, 2 * footprint)))

    out3 = pl.pallas_call(
        _conv_bn_silu_kernel,
        out_shape=jax.ShapeDtypeStruct((n, c2, hw), dtype),
        grid_spec=pltpu.PrefetchScalarGridSpec(
            num_scalar_prefetch=0,
            grid=grid,
            in_specs=[
                pl.BlockSpec((nb, c1, tl), lambda b, o, j: (b, 0, j)),
                pl.BlockSpec((tc2, c1), lambda b, o, j: (o, 0), **const_kwargs),
                pl.BlockSpec((tc2, 1), lambda b, o, j: (o, 0), **const_kwargs),
            ],
            out_specs=pl.BlockSpec((nb, tc2, tl), lambda b, o, j: (b, o, j)),
        ),
        compiler_params=pltpu.CompilerParams(
            dimension_semantics=("parallel", "parallel", "parallel"),
            vmem_limit_bytes=vmem_limit,
        ),
    )(x3, w_folded, bias)

    return out3.reshape(n, c2, h, w)


if __name__ == "__main__":
    key = jax.random.PRNGKey(0)
    kx, kw, kg, kb, km, kv = jax.random.split(key, 6)

    # Small shapes consistent with Conv8 defaults: NCHW, k=1, s=1.
    n, c1, c2, h, w = 2, 4, 8, 16, 16
    x = jax.random.normal(kx, (n, c1, h, w), dtype=jnp.float32)
    weight = 0.1 * jax.random.normal(kw, (c2, c1, 1, 1), dtype=jnp.float32)
    gamma = 1.0 + 0.1 * jax.random.normal(kg, (c2,), dtype=jnp.float32)
    beta = 0.1 * jax.random.normal(kb, (c2,), dtype=jnp.float32)
    running_mean = 0.1 * jax.random.normal(km, (c2,), dtype=jnp.float32)
    running_var = jax.random.uniform(kv, (c2,), dtype=jnp.float32,
                                     minval=0.5, maxval=1.5)
    eps = 1e-5

    out = conv8_forward(x, weight, gamma, beta, running_mean, running_var, eps)
    out = jax.block_until_ready(out)

    # Pure-JAX reference: Conv2d(1x1, no bias) -> eval-mode BatchNorm2d -> SiLU.
    y = jnp.einsum("oc,nchw->nohw", weight.reshape(c2, c1), x,
                   precision=jax.lax.Precision.HIGHEST)
    s = gamma / jnp.sqrt(running_var + eps)
    b_ = beta - running_mean * s
    y = y * s[None, :, None, None] + b_[None, :, None, None]
    ref = y * jax.nn.sigmoid(y)

    assert out.shape == ref.shape and out.dtype == ref.dtype
    # Tolerance covers MXU default-precision f32 matmul passes and the EUP
    # tanh-based sigmoid; a real bug would be orders of magnitude larger.
    max_err = float(jnp.max(jnp.abs(out - ref)))
    assert jnp.allclose(out, ref, rtol=5e-3, atol=5e-3), max_err

    print("KERNEL_OK")
</pallas_src>

<mosaic_0001>
module attributes {stable_mosaic.version = 11 : i64} {
  func.func @_conv_bn_silu_kernel(%arg0: i32, %arg1: i32, %arg2: i32, %arg3: memref<2x4x256xf32, #tpu.memory_space<vmem>>, %arg4: memref<8x4xf32, #tpu.memory_space<vmem>>, %arg5: memref<8x1xf32, #tpu.memory_space<vmem>>, %arg6: memref<2x8x256xf32, #tpu.memory_space<vmem>>) attributes {dimension_semantics = [#tpu.dimension_semantics<parallel>, #tpu.dimension_semantics<parallel>, #tpu.dimension_semantics<parallel>], iteration_bounds = array<i64: 1, 1, 1>, scalar_prefetch = 0 : i64, scratch_operands = 0 : i64, tpu.core_type = #tpu.core_type<tc>, window_params = [{transform_indices = @transform_0, window_bounds = array<i64: 2, 4, 256>}, {pipeline_mode = #tpu.pipeline_mode<synchronous>, transform_indices = @transform_1, window_bounds = array<i64: 8, 4>}, {pipeline_mode = #tpu.pipeline_mode<synchronous>, transform_indices = @transform_2, window_bounds = array<i64: 8, 1>}, {transform_indices = @transform_3, window_bounds = array<i64: 2, 8, 256>}]} {
    %c0 = arith.constant 0 : index
    %c0_0 = arith.constant 0 : index
    %0 = vector.load %arg4[%c0, %c0_0] : memref<8x4xf32, #tpu.memory_space<vmem>>, vector<8x4xf32>
    %c0_1 = arith.constant 0 : index
    %c0_2 = arith.constant 0 : index
    %1 = vector.load %arg5[%c0_1, %c0_2] : memref<8x1xf32, #tpu.memory_space<vmem>>, vector<8x1xf32>
    %c0_3 = arith.constant 0 : index
    %c0_4 = arith.constant 0 : index
    %c0_5 = arith.constant 0 : index
    %2 = vector.load %arg3[%c0_3, %c0_4, %c0_5] : memref<2x4x256xf32, #tpu.memory_space<vmem>>, vector<1x4x256xf32>
    %3 = vector.shape_cast %2 : vector<1x4x256xf32> to vector<4x256xf32>
    %cst = arith.constant dense<0.000000e+00> : vector<8x256xf32>
    %4 = tpu.matmul %0, %3, %cst {dimension_numbers = #tpu.dot_dimension_numbers<[1], [0], [0], [1], [0, 0, 1, 1], [], []>} : vector<8x4xf32>, vector<4x256xf32>, vector<8x256xf32> -> vector<8x256xf32>
    %5 = vector.broadcast %1 : vector<8x1xf32> to vector<8x256xf32>
    %6 = arith.addf %4, %5 : vector<8x256xf32>
    %cst_6 = arith.constant 5.000000e-01 : f32
    %7 = vector.broadcast %cst_6 : f32 to vector<8x256xf32>
    %8 = arith.mulf %7, %6 : vector<8x256xf32>
    %9 = math.tanh %8 : vector<8x256xf32>
    %cst_7 = arith.constant 5.000000e-01 : f32
    %10 = vector.broadcast %cst_7 : f32 to vector<8x256xf32>
    %11 = arith.mulf %10, %9 : vector<8x256xf32>
    %cst_8 = arith.constant 5.000000e-01 : f32
    %12 = vector.broadcast %cst_8 : f32 to vector<8x256xf32>
    %13 = arith.addf %11, %12 : vector<8x256xf32>
    %14 = arith.mulf %6, %13 : vector<8x256xf32>
    %c0_9 = arith.constant 0 : index
    %c0_10 = arith.constant 0 : index
    %c0_11 = arith.constant 0 : index
    %15 = vector.load %arg6[%c0_9, %c0_10, %c0_11] : memref<2x8x256xf32, #tpu.memory_space<vmem>>, vector<1x8x256xf32>
    %16 = vector.shape_cast %15 : vector<1x8x256xf32> to vector<8x256xf32>
    %17 = vector.shape_cast %14 : vector<8x256xf32> to vector<1x8x256xf32>
    tpu.vector_store %arg6[%c0_9, %c0_10, %c0_11], %17 {strides = array<i32>} : memref<2x8x256xf32, #tpu.memory_space<vmem>>, vector<1x8x256xf32>,
    %c1 = arith.constant 1 : index
    %c0_12 = arith.constant 0 : index
    %c0_13 = arith.constant 0 : index
    %18 = vector.load %arg3[%c1, %c0_12, %c0_13] : memref<2x4x256xf32, #tpu.memory_space<vmem>>, vector<1x4x256xf32>
    %19 = vector.shape_cast %18 : vector<1x4x256xf32> to vector<4x256xf32>
    %cst_14 = arith.constant dense<0.000000e+00> : vector<8x256xf32>
    %20 = tpu.matmul %0, %19, %cst_14 {dimension_numbers = #tpu.dot_dimension_numbers<[1], [0], [0], [1], [0, 0, 1, 1], [], []>} : vector<8x4xf32>, vector<4x256xf32>, vector<8x256xf32> -> vector<8x256xf32>
    %21 = vector.broadcast %1 : vector<8x1xf32> to vector<8x256xf32>
    %22 = arith.addf %20, %21 : vector<8x256xf32>
    %cst_15 = arith.constant 5.000000e-01 : f32
    %23 = vector.broadcast %cst_15 : f32 to vector<8x256xf32>
    %24 = arith.mulf %23, %22 : vector<8x256xf32>
    %25 = math.tanh %24 : vector<8x256xf32>
    %cst_16 = arith.constant 5.000000e-01 : f32
    %26 = vector.broadcast %cst_16 : f32 to vector<8x256xf32>
    %27 = arith.mulf %26, %25 : vector<8x256xf32>
    %cst_17 = arith.constant 5.000000e-01 : f32
    %28 = vector.broadcast %cst_17 : f32 to vector<8x256xf32>
    %29 = arith.addf %27, %28 : vector<8x256xf32>
    %30 = arith.mulf %22, %29 : vector<8x256xf32>
    %c1_18 = arith.constant 1 : index
    %c0_19 = arith.constant 0 : index
    %c0_20 = arith.constant 0 : index
    %31 = vector.load %arg6[%c1_18, %c0_19, %c0_20] : memref<2x8x256xf32, #tpu.memory_space<vmem>>, vector<1x8x256xf32>
    %32 = vector.shape_cast %31 : vector<1x8x256xf32> to vector<8x256xf32>
    %33 = vector.shape_cast %30 : vector<8x256xf32> to vector<1x8x256xf32>
    tpu.vector_store %arg6[%c1_18, %c0_19, %c0_20], %33 {strides = array<i32>} : memref<2x8x256xf32, #tpu.memory_space<vmem>>, vector<1x8x256xf32>,
    return
  }
  func.func @transform_0(%arg0: i32, %arg1: i32, %arg2: i32) -> (i32, i32, i32) {
    %c0_i32 = arith.constant 0 : i32
    %c0_i32_0 = arith.constant 0 : i32
    return %arg0, %c0_i32, %arg2 : i32, i32, i32
  }
  func.func @transform_1(%arg0: i32, %arg1: i32, %arg2: i32) -> (i32, i32) {
    %c0_i32 = arith.constant 0 : i32
    %c0_i32_0 = arith.constant 0 : i32
    return %arg1, %c0_i32 : i32, i32
  }
  func.func @transform_2(%arg0: i32, %arg1: i32, %arg2: i32) -> (i32, i32) {
    %c0_i32 = arith.constant 0 : i32
    %c0_i32_0 = arith.constant 0 : i32
    return %arg1, %c0_i32 : i32, i32
  }
  func.func @transform_3(%arg0: i32, %arg1: i32, %arg2: i32) -> (i32, i32, i32) {
    %c0_i32 = arith.constant 0 : i32
    return %arg0, %arg1, %arg2 : i32, i32, i32
  }
}

</mosaic_0001>

<llo_original>
// kernel: tpu_custom_call.1
$region0: #{tpu_custom_call.1}
  #allocation0 [shape = 'u32[]', space=smem, size = 0x4, offset = 0x4, fixed_abs, tag = 'smem constant byte address 0x4 - core index']
  #allocation1 [shape = 'u32[144,128]{1,0:T(1,128)}', space=vmem, size = 0x12000, scoped, tag = 'internal scratch']
  %s0 = inlined_call_operand.vmem [shape: f32[2,4,256], index: 0, kind: input, shape index: {}]
  %s1 = inlined_call_operand.vmem [shape: f32[8,4], index: 1, kind: input, shape index: {}]
  %s2 = inlined_call_operand.vmem [shape: f32[8,1], index: 2, kind: input, shape index: {}]
  %s3 = inlined_call_operand.hbm [shape: f32[2,8,256], index: 3, kind: output, shape index: {}]
  %s4 = sld [smem:[#allocation0]]
  $region22: #{tpu_custom_call.1} parent=0
    _
  %s6 = ssub.s32 1, %s4
  %s7 = scalar_select 0, %s6, %s4
  $region1: #{tpu_custom_call.1} parent=0
    #allocation2 [shape = 'u8[16384]{0}', space=vmem, size = 0x4000, scoped, tag = 'output window, operand 0, single buffered']
    #allocation3 [shape = 's32[1]{0}', space=sflag, size = 0x4, scoped, tag = 'scoped memory for tpu_custom_call.1']
    %8 = vsyncpa [#allocation3], 0
    // Predicated region
    $region2: #{tpu_custom_call.1} parent=1 // pred_check
      _
    $region3: #{tpu_custom_call.1} parent=1 // pred_check_branch
      %10 = sbr.rel (0) target = $region5
    $region4: #{tpu_custom_call.1} parent=1 // pred_region
      _
    $region5: #{tpu_custom_call.1} parent=1 // pred_fallthru
      _
    // Predicated region
    $region6: #{tpu_custom_call.1} parent=1 // pred_check
      _
    $region7: #{tpu_custom_call.1} parent=1 // pred_check_branch
      %12 = sbr.rel (0) target = $region9
    $region8: #{tpu_custom_call.1} parent=1 // pred_region
      _
    $region9: #{tpu_custom_call.1} parent=1 // pred_fallthru
      _
    // Predicated region
    $region10: #{tpu_custom_call.1} parent=1 // pred_check
      _
    $region11: #{tpu_custom_call.1} parent=1 // pred_check_branch
      %14 = sbr.rel (0) target = $region13
    $region12: #{tpu_custom_call.1} parent=1 // pred_region
      _
    $region13: #{tpu_custom_call.1} parent=1 // pred_fallthru
      _
    %v15 = vld [vmem:[%s1] sm:$0xff]
    %v16 = vld [vmem:[%s2] sm:$0xff]
    %v17 = vld [vmem:[%s0] sm:$0xff]
    %19 = vset.pattern.permute.xlu0 0
    %20 = vperm.xlu0 %19, %v16
    %v21 = vpop.permute.xlu0 %20
    %v24 = vcombine.high %v17, %v17
    %vm25 = vcmask 31744
    %v27 = vsel %vm25, %v15, 0
    %vm29 = vcmask 1043456
    %v30 = vsel %vm29, %v17, 0
    %v32 = vsel %vm29, %v24, 0
    %34 = vmatprep.subr.mxu0 %v32
    %35 = vmatpush1.msra.mxu0 %v30
    %36 = vmatprep.subr.mxu0 0.0
    %37 = vmatpush1.msra.mxu0 0.0
    %38 = vmatprep.subr.mxu0 0.0
    %39 = vmatpush1.msra.mxu0 0.0
    %40 = vmatprep.subr.mxu0 0.0
    %41 = vmatpush1.msra.mxu0 0.0
    %42 = vmatprep.subr.mxu0 0.0
    %43 = vmatpush1.msra.mxu0 0.0
    %44 = vmatprep.subr.mxu0 0.0
    %45 = vmatpush1.msra.mxu0 0.0
    %46 = vmatprep.subr.mxu0 0.0
    %47 = vmatpush1.msra.mxu0 0.0
    %48 = vmatprep.subr.mxu0 0.0
    %49 = vmatpush1.msra.mxu0 0.0
    %50 = vmatprep.subr.mxu0 0.0
    %51 = vmatpush1.msra.mxu0 0.0
    %52 = vmatprep.subr.mxu0 0.0
    %53 = vmatpush1.msra.mxu0 0.0
    %54 = vmatprep.subr.mxu0 0.0
    %55 = vmatpush1.msra.mxu0 0.0
    %56 = vmatprep.subr.mxu0 0.0
    %57 = vmatpush1.msra.mxu0 0.0
    %58 = vmatprep.subr.mxu0 0.0
    %59 = vmatpush1.msra.mxu0 0.0
    %60 = vmatprep.subr.mxu0 0.0
    %61 = vmatpush1.msra.mxu0 0.0
    %62 = vmatprep.subr.mxu0 0.0
    %63 = vmatpush1.msra.mxu0 0.0
    %64 = vmatprep.subr.mxu0 0.0
    %65 = vmatpush1.msra.mxu0 0.0
    %66 = vmatprep.subr.mxu0 0.0
    %67 = vmatpush1.msra.mxu0 0.0
    %68 = vmatprep.subr.mxu0 0.0
    %69 = vmatpush1.msra.mxu0 0.0
    %70 = vmatprep.subr.mxu0 0.0
    %71 = vmatpush1.msra.mxu0 0.0
    %72 = vmatprep.subr.mxu0 0.0
    %73 = vmatpush1.msra.mxu0 0.0
    %74 = vmatprep.subr.mxu0 0.0
    %75 = vmatpush1.msra.mxu0 0.0
    %76 = vmatprep.subr.mxu0 0.0
    %77 = vmatpush1.msra.mxu0 0.0
    %78 = vmatprep.subr.mxu0 0.0
    %79 = vmatpush1.msra.mxu0 0.0
    %80 = vmatprep.subr.mxu0 0.0
    %81 = vmatpush1.msra.mxu0 0.0
    %82 = vmatprep.subr.mxu0 0.0
    %83 = vmatpush1.msra.mxu0 0.0
    %84 = vmatprep.subr.mxu0 0.0
    %85 = vmatpush1.msra.mxu0 0.0
    %86 = vmatprep.subr.mxu0 0.0
    %87 = vmatpush1.msra.mxu0 0.0
    %88 = vmatprep.subr.mxu0 0.0
    %89 = vmatpush1.msra.mxu0 0.0
    %90 = vmatprep.subr.mxu0 0.0
    %91 = vmatpush1.msra.mxu0 0.0
    %92 = vmatprep.subr.mxu0 0.0
    %93 = vmatpush1.msra.mxu0 0.0
    %94 = vmatprep.subr.mxu0 0.0
    %95 = vmatpush1.msra.mxu0 0.0
    %96 = vmatprep.subr.mxu0 0.0
    %97 = vmatpush1.msra.mxu0 0.0
    %98 = vmatprep.mubr.f32.mxu0 0.0
    %99 = vmatmul.mubr.f32.gmra.mrb[0].mxu0 %v27
    %v100 = vpop.f32.mrb[0].mxu0
    %v101 = vadd.f32 %v21, %v100
    %v102 = vpop.f32.mrb[0].mxu0
    %v103 = vadd.f32 %v21, %v102
    %104 = vdwg.mxu0
    %v105 = vmul.f32 %v101, 0.5
    %v106 = vmul.f32 %v103, 0.5
    %v107 = vtanh.pop %v105
    %v108 = vtanh.pop %v106
    %v109 = vmul.f32 %v107, 0.5
    %v110 = vmul.f32 %v108, 0.5
    %v111 = vadd.f32 %v109, 0.5
    %v112 = vadd.f32 %v110, 0.5
    %v113 = vmul.f32 %v101, %v111
    %v114 = vmul.f32 %v103, %v112
    %115 = vst [vmem:[#allocation2] sm:$0xff] %v113
    %116 = vst [vmem:[#allocation2 + $0x8] sm:$0xff] %v114
    %s117 = scalar_lea.vmem %s0, 8
    %v118 = vld [vmem:[%s117] sm:$0xff]
    %v120 = vcombine.high %v118, %v118
    %v121 = vsel %vm29, %v118, 0
    %v123 = vsel %vm29, %v120, 0
    %125 = vmatprep.subr.mxu0 %v123
    %126 = vmatpush1.msra.mxu0 %v121
    %127 = vmatprep.subr.mxu0 0.0
    %128 = vmatpush1.msra.mxu0 0.0
    %129 = vmatprep.subr.mxu0 0.0
    %130 = vmatpush1.msra.mxu0 0.0
    %131 = vmatprep.subr.mxu0 0.0
    %132 = vmatpush1.msra.mxu0 0.0
    %133 = vmatprep.subr.mxu0 0.0
    %134 = vmatpush1.msra.mxu0 0.0
    %135 = vmatprep.subr.mxu0 0.0
    %136 = vmatpush1.msra.mxu0 0.0
    %137 = vmatprep.subr.mxu0 0.0
    %138 = vmatpush1.msra.mxu0 0.0
    %139 = vmatprep.subr.mxu0 0.0
    %140 = vmatpush1.msra.mxu0 0.0
    %141 = vmatprep.subr.mxu0 0.0
    %142 = vmatpush1.msra.mxu0 0.0
    %143 = vmatprep.subr.mxu0 0.0
    %144 = vmatpush1.msra.mxu0 0.0
    %145 = vmatprep.subr.mxu0 0.0
    %146 = vmatpush1.msra.mxu0 0.0
    %147 = vmatprep.subr.mxu0 0.0
    %148 = vmatpush1.msra.mxu0 0.0
    %149 = vmatprep.subr.mxu0 0.0
    %150 = vmatpush1.msra.mxu0 0.0
    %151 = vmatprep.subr.mxu0 0.0
    %152 = vmatpush1.msra.mxu0 0.0
    %153 = vmatprep.subr.mxu0 0.0
    %154 = vmatpush1.msra.mxu0 0.0
    %155 = vmatprep.subr.mxu0 0.0
    %156 = vmatpush1.msra.mxu0 0.0
    %157 = vmatprep.subr.mxu0 0.0
    %158 = vmatpush1.msra.mxu0 0.0
    %159 = vmatprep.subr.mxu0 0.0
    %160 = vmatpush1.msra.mxu0 0.0
    %161 = vmatprep.subr.mxu0 0.0
    %162 = vmatpush1.msra.mxu0 0.0
    %163 = vmatprep.subr.mxu0 0.0
    %164 = vmatpush1.msra.mxu0 0.0
    %165 = vmatprep.subr.mxu0 0.0
    %166 = vmatpush1.msra.mxu0 0.0
    %167 = vmatprep.subr.mxu0 0.0
    %168 = vmatpush1.msra.mxu0 0.0
    %169 = vmatprep.subr.mxu0 0.0
    %170 = vmatpush1.msra.mxu0 0.0
    %171 = vmatprep.subr.mxu0 0.0
    %172 = vmatpush1.msra.mxu0 0.0
    %173 = vmatprep.subr.mxu0 0.0
    %174 = vmatpush1.msra.mxu0 0.0
    %175 = vmatprep.subr.mxu0 0.0
    %176 = vmatpush1.msra.mxu0 0.0
    %177 = vmatprep.subr.mxu0 0.0
    %178 = vmatpush1.msra.mxu0 0.0
    %179 = vmatprep.subr.mxu0 0.0
    %180 = vmatpush1.msra.mxu0 0.0
    %181 = vmatprep.subr.mxu0 0.0
    %182 = vmatpush1.msra.mxu0 0.0
    %183 = vmatprep.subr.mxu0 0.0
    %184 = vmatpush1.msra.mxu0 0.0
    %185 = vmatprep.subr.mxu0 0.0
    %186 = vmatpush1.msra.mxu0 0.0
    %187 = vmatprep.subr.mxu0 0.0
    %188 = vmatpush1.msra.mxu0 0.0
    %189 = vmatprep.mubr.f32.mxu0 0.0
    %190 = vmatmul.mubr.f32.gmra.mrb[0].mxu0 %v27
    %v191 = vpop.f32.mrb[0].mxu0
    %v192 = vadd.f32 %v21, %v191
    %v193 = vpop.f32.mrb[0].mxu0
    %v194 = vadd.f32 %v21, %v193
    %195 = vdwg.mxu0
    %v196 = vmul.f32 %v192, 0.5
    %v197 = vmul.f32 %v194, 0.5
    %v198 = vtanh.pop %v196
    %v199 = vtanh.pop %v197
    %v200 = vmul.f32 %v198, 0.5
    %v201 = vmul.f32 %v199, 0.5
    %v202 = vadd.f32 %v200, 0.5
    %v203 = vadd.f32 %v201, 0.5
    %v204 = vmul.f32 %v192, %v202
    %v205 = vmul.f32 %v194, %v203
    %s206 = scalar_lea.vmem [#allocation2], 16
    %207 = vst [vmem:[%s206] sm:$0xff] %v204
    %208 = vst [vmem:[%s206 + $0x8] sm:$0xff] %v205
    // Predicated region
    $region14: #{tpu_custom_call.1} parent=1 // pred_check
      _
    $region15: #{tpu_custom_call.1} parent=1 // pred_check_branch
      %210 = sbr.rel (0) target = $region17
    $region16: #{tpu_custom_call.1} parent=1 // pred_region
      %s212 = ssub.s32 512, 512
      %213 = vsyncadd [#allocation3], %s212
      %s214 = sshll.u32 [#allocation2], 4
      %s215 = int_to_ptr.vmem [resolvable:$true] %s214
      %220 = dma.vmem_to_hbm [thread:$0]  %s215, 512, %s3, [#allocation3], 256, 256, 16
    $region17: #{tpu_custom_call.1} parent=1 // pred_fallthru
      _
    // Predicated region
    $region18: #{tpu_custom_call.1} parent=1 // pred_check
      _
    $region19: #{tpu_custom_call.1} parent=1 // pred_check_branch
      %222 = sbr.rel (0) target = $region21
    $region20: #{tpu_custom_call.1} parent=1 // pred_region
      %223 = dma.done [#allocation3], 512
    $region21: #{tpu_custom_call.1} parent=1 // pred_fallthru
      _
    %224 = vsyncpa [#allocation3], 1

</llo_original>
